<compile_context>
chip_gen: v6e
topology: v6e:2x2x1
jax: 0.10.0
libtpu: 0.0.40
codegen_flags: <defaults>
</compile_context>

<pallas_src>
import functools

import jax
import jax.numpy as jnp
import numpy as np
from jax.experimental import pallas as pl
from jax.experimental.pallas import tpu as pltpu


def _round_up(v: int, m: int) -> int:
    return (v + m - 1) // m * m


def preemphasis_kernel(x_ref, o_ref, carry_ref, *, coef: float):
    """x_ref/o_ref: VMEM (bt, tt); carry_ref: VMEM (bt, 1) scratch."""
    j = pl.program_id(1)  # T-tile index (innermost, sequential)

    x = x_ref[...]

    # prev[:, t] = x[:, t-1] within the tile (column 0 wraps; fixed below).
    prev = pltpu.roll(x, shift=1, axis=1)
    o_ref[...] = x - coef * prev

    # Boundary column t = 0 of this tile.
    @pl.when(j == 0)
    def _():
        # Reflect pad: the "previous" sample of x[:, 0] is x[:, 1].
        o_ref[:, 0:1] = x[:, 0:1] - coef * x[:, 1:2]

    @pl.when(j != 0)
    def _():
        # Previous T-tile's last sample, carried in scratch.
        o_ref[:, 0:1] = x[:, 0:1] - coef * carry_ref[...]

    # Carry this tile's last sample into the next T-tile.
    carry_ref[...] = x[:, -1:]


def pre_emphasis(x: jax.Array, coef: float = 0.97, *, btile: int = 32,
                 ttile: int = 16384) -> jax.Array:
    """x: (B, T) -> (B, T), out[:, t] = x[:, t] - coef * x[:, t-1] (reflect at t=0)."""
    B, T = x.shape
    if T < 2:
        raise ValueError("PreEmphasis requires T >= 2 (reflect pad of width 1).")

    # Normalize tile params to hardware alignment (sublane 8 / lane 128).
    btile = max(8, _round_up(btile, 8))
    ttile = max(128, _round_up(ttile, 128))

    # Block shape: either full-extent (allowed for any size) or an aligned
    # tile; partial trailing blocks are masked by Pallas (no explicit pad).
    bt = B if B <= btile else btile
    tt = T if T <= ttile else ttile
    grid = (pl.cdiv(B, bt), pl.cdiv(T, tt))

    kernel = functools.partial(preemphasis_kernel, coef=float(coef))

    return pl.pallas_call(
        kernel,
        out_shape=jax.ShapeDtypeStruct((B, T), x.dtype),
        grid_spec=pltpu.PrefetchScalarGridSpec(
            num_scalar_prefetch=0,
            grid=grid,
            in_specs=[pl.BlockSpec((bt, tt), lambda i, j: (i, j))],
            out_specs=pl.BlockSpec((bt, tt), lambda i, j: (i, j)),
            scratch_shapes=[pltpu.VMEM((bt, 1), x.dtype)],
        ),
        compiler_params=pltpu.CompilerParams(
            dimension_semantics=("parallel", "arbitrary")),
    )(x)


def pre_emphasis_ref(x: jax.Array, coef: float = 0.97) -> jax.Array:
    """Pure-JAX reference mirroring F.pad(..., 'reflect') + conv1d([-coef, 1])."""
    prev = jnp.concatenate([x[:, 1:2], x[:, :-1]], axis=-1)
    return x - coef * prev


if __name__ == "__main__":
    key = jax.random.PRNGKey(0)
    B, T = 2, 256  # small audio-like shape: batch=2, seq=256
    x = jax.random.normal(key, (B, T), dtype=jnp.float32)

    out = jax.block_until_ready(pre_emphasis(x, coef=0.97))
    ref = pre_emphasis_ref(x, coef=0.97)
    np.testing.assert_allclose(np.asarray(out), np.asarray(ref), rtol=1e-6, atol=1e-6)

    # Non-multiple T with multiple T-tiles: exercises the cross-tile carry
    # scratch and the partial trailing-block masking (320 = 2*128 + 64).
    x2 = jax.random.normal(jax.random.PRNGKey(1), (3, 320), dtype=jnp.float32)
    out2 = jax.block_until_ready(pre_emphasis(x2, coef=0.97, btile=8, ttile=128))
    ref2 = pre_emphasis_ref(x2, coef=0.97)
    np.testing.assert_allclose(np.asarray(out2), np.asarray(ref2), rtol=1e-6, atol=1e-6)

    # Partial blocks along BOTH grid axes (10 = 8 + 2 rows, 200 = 128 + 72 cols).
    x3 = jax.random.normal(jax.random.PRNGKey(2), (10, 200), dtype=jnp.float32)
    out3 = jax.block_until_ready(pre_emphasis(x3, coef=0.97, btile=8, ttile=128))
    ref3 = pre_emphasis_ref(x3, coef=0.97)
    np.testing.assert_allclose(np.asarray(out3), np.asarray(ref3), rtol=1e-6, atol=1e-6)

    print("KERNEL_OK")
</pallas_src>

<mosaic_0001>
module attributes {stable_mosaic.version = 11 : i64} {
  func.func @preemphasis_kernel(%arg0: i32, %arg1: i32, %arg2: memref<2x256xf32, #tpu.memory_space<vmem>>, %arg3: memref<2x256xf32, #tpu.memory_space<vmem>>, %arg4: memref<2x1xf32, #tpu.memory_space<vmem>>) attributes {dimension_semantics = [#tpu.dimension_semantics<parallel>, #tpu.dimension_semantics<arbitrary>], iteration_bounds = array<i64: 1, 1>, scalar_prefetch = 0 : i64, scratch_operands = 1 : i64, tpu.core_type = #tpu.core_type<tc>, window_params = [{transform_indices = @transform_0, window_bounds = array<i64: 2, 256>}, {transform_indices = @transform_1, window_bounds = array<i64: 2, 256>}]} {
    %c0 = arith.constant 0 : index
    %c0_0 = arith.constant 0 : index
    %0 = vector.load %arg2[%c0, %c0_0] : memref<2x256xf32, #tpu.memory_space<vmem>>, vector<2x256xf32>
    %c1_i32 = arith.constant 1 : i32
    %1 = tpu.dynamic_rotate %0 by %c1_i32 dim 1 : vector<2x256xf32>, i32 -> vector<2x256xf32>
    %cst = arith.constant 9.700000e-01 : f32
    %2 = vector.broadcast %cst : f32 to vector<2x256xf32>
    %3 = arith.mulf %2, %1 : vector<2x256xf32>
    %4 = arith.subf %0, %3 : vector<2x256xf32>
    %c0_1 = arith.constant 0 : index
    %c0_2 = arith.constant 0 : index
    %5 = vector.load %arg3[%c0_1, %c0_2] : memref<2x256xf32, #tpu.memory_space<vmem>>, vector<2x256xf32>
    tpu.vector_store %arg3[%c0_1, %c0_2], %4 {strides = array<i32>} : memref<2x256xf32, #tpu.memory_space<vmem>>, vector<2x256xf32>,
    %c0_i32 = arith.constant 0 : i32
    %6 = arith.cmpi eq, %arg1, %c0_i32 : i32
    %7 = arith.extui %6 : i1 to i32
    %c0_i32_3 = arith.constant 0 : i32
    %8 = arith.cmpi ne, %7, %c0_i32_3 : i32
    scf.if %8 {
      %14 = vector.extract_strided_slice %0 {offsets = [0, 0], sizes = [2, 1], strides = [1, 1]} : vector<2x256xf32> to vector<2x1xf32>
      %15 = vector.extract_strided_slice %0 {offsets = [0, 1], sizes = [2, 1], strides = [1, 1]} : vector<2x256xf32> to vector<2x1xf32>
      %cst_8 = arith.constant 9.700000e-01 : f32
      %16 = vector.broadcast %cst_8 : f32 to vector<2x1xf32>
      %17 = arith.mulf %16, %15 : vector<2x1xf32>
      %18 = arith.subf %14, %17 : vector<2x1xf32>
      %c0_9 = arith.constant 0 : index
      %c0_10 = arith.constant 0 : index
      %19 = vector.load %arg3[%c0_9, %c0_10] : memref<2x256xf32, #tpu.memory_space<vmem>>, vector<2x1xf32>
      tpu.vector_store %arg3[%c0_9, %c0_10], %18 {strides = array<i32>} : memref<2x256xf32, #tpu.memory_space<vmem>>, vector<2x1xf32>,
    } else {
    }
    %c0_i32_4 = arith.constant 0 : i32
    %9 = arith.cmpi ne, %arg1, %c0_i32_4 : i32
    %10 = arith.extui %9 : i1 to i32
    %c0_i32_5 = arith.constant 0 : i32
    %11 = arith.cmpi ne, %10, %c0_i32_5 : i32
    scf.if %11 {
      %14 = vector.extract_strided_slice %0 {offsets = [0, 0], sizes = [2, 1], strides = [1, 1]} : vector<2x256xf32> to vector<2x1xf32>
      %c0_8 = arith.constant 0 : index
      %c0_9 = arith.constant 0 : index
      %15 = vector.load %arg4[%c0_8, %c0_9] : memref<2x1xf32, #tpu.memory_space<vmem>>, vector<2x1xf32>
      %cst_10 = arith.constant 9.700000e-01 : f32
      %16 = vector.broadcast %cst_10 : f32 to vector<2x1xf32>
      %17 = arith.mulf %16, %15 : vector<2x1xf32>
      %18 = arith.subf %14, %17 : vector<2x1xf32>
      %c0_11 = arith.constant 0 : index
      %c0_12 = arith.constant 0 : index
      %19 = vector.load %arg3[%c0_11, %c0_12] : memref<2x256xf32, #tpu.memory_space<vmem>>, vector<2x1xf32>
      tpu.vector_store %arg3[%c0_11, %c0_12], %18 {strides = array<i32>} : memref<2x256xf32, #tpu.memory_space<vmem>>, vector<2x1xf32>,
    } else {
    }
    %12 = vector.extract_strided_slice %0 {offsets = [0, 255], sizes = [2, 1], strides = [1, 1]} : vector<2x256xf32> to vector<2x1xf32>
    %c0_6 = arith.constant 0 : index
    %c0_7 = arith.constant 0 : index
    %13 = vector.load %arg4[%c0_6, %c0_7] : memref<2x1xf32, #tpu.memory_space<vmem>>, vector<2x1xf32>
    tpu.vector_store %arg4[%c0_6, %c0_7], %12 {strides = array<i32>} : memref<2x1xf32, #tpu.memory_space<vmem>>, vector<2x1xf32>,
    return
  }
  func.func @transform_0(%arg0: i32, %arg1: i32) -> (i32, i32) {
    %c0_i32 = arith.constant 0 : i32
    return %arg0, %arg1 : i32, i32
  }
  func.func @transform_1(%arg0: i32, %arg1: i32) -> (i32, i32) {
    %c0_i32 = arith.constant 0 : i32
    return %arg0, %arg1 : i32, i32
  }
}

</mosaic_0001>

<llo_original>
// kernel: tpu_custom_call.1
$region0: #{tpu_custom_call.1}
  #allocation0 [shape = 'u32[]', space=smem, size = 0x4, offset = 0x4, fixed_abs, tag = 'smem constant byte address 0x4 - core index']
  #allocation1 [shape = 'u32[144,128]{1,0:T(1,128)}', space=vmem, size = 0x12000, scoped, tag = 'internal scratch']
  #allocation2 [shape = 'f32[2,1]{1,0:T(2,128)}', space=vmem, size = 0x400, scoped, tag = 'scratch operand']
  %s0 = inlined_call_operand.hbm [shape: f32[2,256], index: 0, kind: input, shape index: {}]
  %s1 = inlined_call_operand.hbm [shape: f32[2,256], index: 1, kind: output, shape index: {}]
  %s2 = sld [smem:[#allocation0]]
  $region26: #{tpu_custom_call.1} parent=0
    _
  %s4 = ssub.s32 1, %s2
  %s5 = scalar_select 0, %s4, %s2
  $region1: #{tpu_custom_call.1} parent=0
    #allocation3 [shape = 'u8[2048]{0}', space=vmem, size = 0x800, scoped, tag = 'input window, operand 0, single buffered']
    #allocation4 [shape = 's32[1]{0}', space=sflag, size = 0x4, scoped, tag = 'scoped memory for tpu_custom_call.1']
    #allocation5 [shape = 's32[1]{0}', space=sflag, size = 0x4, scoped, tag = 'scoped memory for tpu_custom_call.1']
    #allocation6 [shape = 'u8[2048]{0}', space=vmem, size = 0x800, scoped, tag = 'output window, operand 0, single buffered']
    %6 = vsyncpa [#allocation4], 0
    %7 = vsyncpa [#allocation5], 0
    // Predicated region
    $region2: #{tpu_custom_call.1} parent=1 // pred_check
      _
    $region3: #{tpu_custom_call.1} parent=1 // pred_check_branch
      %9 = sbr.rel (0) target = $region5
    $region4: #{tpu_custom_call.1} parent=1 // pred_region
      %s11 = ssub.s32 64, 64
      %12 = vsyncadd [#allocation4], %s11
      %s14 = sshll.u32 [#allocation3], 4
      %s15 = int_to_ptr.vmem [resolvable:$true] %s14
      %17 = dma.hbm_to_vmem [thread:$0]  %s0, 64, %s15, [#allocation4]
    $region5: #{tpu_custom_call.1} parent=1 // pred_fallthru
      _
    // Predicated region
    $region6: #{tpu_custom_call.1} parent=1 // pred_check
      _
    $region7: #{tpu_custom_call.1} parent=1 // pred_check_branch
      %19 = sbr.rel (0) target = $region9
    $region8: #{tpu_custom_call.1} parent=1 // pred_region
      %20 = dma.done [#allocation4], 64
    $region9: #{tpu_custom_call.1} parent=1 // pred_fallthru
      _
    %v21 = vld [vmem:[#allocation3] sm:$0xf]
    %v24 = vunpack.c.l.s4 1983009808
    %v25 = vunpack.c.0.s8 %v24
    %v26 = vlaneseq
    %v27 = vshrl.u32 %v26, 7
    %v28 = vsub.s32 %v25, %v27
    %v29 = vrot.slane %v21, %v28
    %v30 = vcombine.high %v29, %v29
    %33 = vrot.lane.b32.xlu0 %v29, 1
    %v34 = vpop.permute.xlu0 %33
    %35 = vrot.lane.b32.xlu0 %v30, 1
    %v36 = vpop.permute.xlu0 %35
    %v37 = vlaneseq
    %v38 = vand.u32 %v37, 127
    %vm39 = vcmp.lt.s32.totalorder %v38, 1
    %v40 = vsel %vm39, %v34, %v36
    %v41 = vsel %vm39, %v36, %v34
    %v42 = vmul.f32 %v41, 0.97
    %v43 = vmul.f32 %v40, 0.97
    %v46 = vcombine.low %v42, %v43
    %v48 = vunpack.c.l.s4 1983009808
    %v49 = vunpack.c.0.s8 %v48
    %v50 = vlaneseq
    %v51 = vshrl.u32 %v50, 7
    %v52 = vsub.s32 %v49, %v51
    %v53 = vrot.slane %v46, %v52
    %v55 = vsub.f32 %v21, %v53
    %56 = vst [vmem:[#allocation6] sm:$0xf] %v55
    %p57 = scmp.eq.s32.totalorder 0, 0
    // Predicated region
    $region10: #{tpu_custom_call.1} parent=1 // pred_check
      %p58 = pneg %p57
    $region11: #{tpu_custom_call.1} parent=1 // pred_check_branch
      %60 = sbr.rel (%p58) target = $region13
    $region12: #{tpu_custom_call.1} parent=1 // pred_region
      %v61 = vmul.f32 %v21, 0.97
      %63 = vrot.lane.b32.xlu0 %v61, 127
      %v64 = vpop.permute.xlu0 %63
      %v66 = vsub.f32 %v21, %v64
      %vm67 = vcmask 1024
      %68 = vst.msk [vmem:[#allocation6] sm:$0x3] %vm67, %v66
    $region13: #{tpu_custom_call.1} parent=1 // pred_fallthru
      _
    %p69 = scmp.ne.s32.totalorder 0, 0
    // Predicated region
    $region14: #{tpu_custom_call.1} parent=1 // pred_check
      %p70 = pneg %p69
    $region15: #{tpu_custom_call.1} parent=1 // pred_check_branch
      %72 = sbr.rel (%p70) target = $region17
    $region16: #{tpu_custom_call.1} parent=1 // pred_region
      %v73 = vld [vmem:[#allocation2] sm:$0x3]
      %v74 = vmul.f32 %v73, 0.97
      %v75 = vsub.f32 %v21, %v74
      %vm76 = vcmask 1024
      %77 = vst.msk [vmem:[#allocation6] sm:$0x3] %vm76, %v75
    $region17: #{tpu_custom_call.1} parent=1 // pred_fallthru
      _
    %78 = vrot.lane.b32.xlu0 %v30, 1
    %v79 = vpop.permute.xlu0 %78
    %vm81 = vcmask 1024
    %82 = vst.msk [vmem:[#allocation2] sm:$0x3] %vm81, %v79
    // Predicated region
    $region18: #{tpu_custom_call.1} parent=1 // pred_check
      _
    $region19: #{tpu_custom_call.1} parent=1 // pred_check_branch
      %84 = sbr.rel (0) target = $region21
    $region20: #{tpu_custom_call.1} parent=1 // pred_region
      %s86 = ssub.s32 64, 64
      %87 = vsyncadd [#allocation5], %s86
      %s89 = sshll.u32 [#allocation6], 4
      %s90 = int_to_ptr.vmem [resolvable:$true] %s89
      %92 = dma.vmem_to_hbm [thread:$0]  %s90, 64, %s1, [#allocation5]
    $region21: #{tpu_custom_call.1} parent=1 // pred_fallthru
      _
    // Predicated region
    $region22: #{tpu_custom_call.1} parent=1 // pred_check
      _
    $region23: #{tpu_custom_call.1} parent=1 // pred_check_branch
      %94 = sbr.rel (0) target = $region25
    $region24: #{tpu_custom_call.1} parent=1 // pred_region
      %95 = dma.done [#allocation5], 64
    $region25: #{tpu_custom_call.1} parent=1 // pred_fallthru
      _
    %96 = vsyncpa [#allocation4], 1
    %97 = vsyncpa [#allocation5], 1

</llo_original>
